<compile_context>
chip_gen: v7x
topology: tpu7x:2x2x1
jax: 0.10.0
libtpu: 0.0.40
codegen_flags: <defaults>
</compile_context>

<pallas_src>
import functools

import jax
import jax.numpy as jnp
from jax.experimental import pallas as pl

_LANE = 128      # lane width (last dim tiling)
_SUBLANE = 8     # f32 sublane count (second-to-last dim tiling)


def _round_up(n, m):
    return (n + m - 1) // m * m


def _mlp_kernel(x_ref, w1_ref, b1_ref, w2_ref, b2_ref, o_ref, cls_ref, *, n_classes):
    # hidden = relu(x @ W1 + b1)    (bf16 MXU dot, f32 accumulate, f32 VPU math)
    h = jnp.dot(x_ref[...], w1_ref[...], preferred_element_type=jnp.float32)
    h = jnp.maximum(h + b1_ref[...], 0.0)

    # logits = hidden @ W2 + b2
    logits = jnp.dot(h.astype(w2_ref.dtype), w2_ref[...],
                     preferred_element_type=jnp.float32)
    logits = logits + b2_ref[...]
    o_ref[...] = logits.astype(o_ref.dtype)

    # Fused argmax over the real class lanes (padded lanes masked out).
    lane = jax.lax.broadcasted_iota(jnp.int32, logits.shape, dimension=1)
    masked = jnp.where(lane < n_classes, logits, jnp.float32(-1e30))
    row_max = jnp.max(masked, axis=-1, keepdims=True)
    # first index achieving the max (matches torch.max / jnp.argmax tie-break)
    big = jnp.int32(logits.shape[-1])
    idx = jnp.min(jnp.where(masked == row_max, lane, big), axis=-1, keepdims=True)
    cls_ref[...] = jnp.broadcast_to(idx, cls_ref.shape)


@jax.jit
def sent_classifier_forward(x, w1, b1, w2, b2):
    """Returns (logits (batch, n_classes) f32, predicted_class (batch,) int32)."""
    batch, input_dim = x.shape
    hidden = w1.shape[1]
    n_classes = w2.shape[1]

    # Padded, vreg-friendly shapes.
    B = _round_up(batch, _SUBLANE)
    K = _round_up(input_dim, _LANE)
    H = _round_up(hidden, _LANE)      # 500 -> 512
    C = _round_up(n_classes, _LANE)   # 2   -> 128 (lane-dense output store)

    # Zero-pad + bf16 cast for the matmul operands; biases stay f32.
    xp = jnp.zeros((B, K), jnp.bfloat16).at[:batch, :input_dim].set(
        x.astype(jnp.bfloat16))
    w1p = jnp.zeros((K, H), jnp.bfloat16).at[:input_dim, :hidden].set(
        w1.astype(jnp.bfloat16))
    b1p = jnp.zeros((1, H), jnp.float32).at[:, :hidden].set(b1.astype(jnp.float32))
    w2p = jnp.zeros((H, C), jnp.bfloat16).at[:hidden, :n_classes].set(
        w2.astype(jnp.bfloat16))
    b2p = jnp.zeros((1, C), jnp.float32).at[:, :n_classes].set(b2.astype(jnp.float32))

    full = lambda shape: pl.BlockSpec(shape, lambda: (0,) * len(shape))
    kernel = functools.partial(_mlp_kernel, n_classes=n_classes)

    # TODO(synk): if batch grows large, add a batch grid axis (tiles of 256-512
    # rows, weights full-resident) with dimension_semantics=("parallel",) so
    # v7x's two TensorCores split it; at this size a single block is optimal.
    logits_p, cls_p = pl.pallas_call(
        kernel,
        out_shape=(jax.ShapeDtypeStruct((B, C), jnp.float32),
                   jax.ShapeDtypeStruct((B, C), jnp.int32)),
        grid=(),
        in_specs=[full(xp.shape), full(w1p.shape), full(b1p.shape),
                  full(w2p.shape), full(b2p.shape)],
        out_specs=(full((B, C)), full((B, C))),
    )(xp, w1p, b1p, w2p, b2p)

    return logits_p[:batch, :n_classes], cls_p[:batch, 0]


def sent_classifier(x, params):
    """Mirrors SentClassifier.forward(sentence_vec) with target=None.

    Returns (logits, predicted_class) as device arrays — no host sync here.
    Use class_index_to_label() outside the hot path for the string result.
    """
    w1, b1, w2, b2 = params
    return sent_classifier_forward(x, w1, b1, w2, b2)
    # TODO(synk): CrossEntropyLoss branch (target is not None) not implemented.


def class_index_to_label(idx):
    """Host-side mapping of torch.max class index -> string (row-0 semantics)."""
    return 'positive' if int(idx) == 0 else 'negative'


def init_params(key, input_dim, n_classes, hidden_dim=500):
    """Deterministic synthetic parameters (PyTorch Linear-style uniform init),
    stored as (in_features, out_features) so the kernel computes x @ W + b."""
    k1, k2, k3, k4 = jax.random.split(key, 4)
    lim1 = 1.0 / jnp.sqrt(input_dim)
    lim2 = 1.0 / jnp.sqrt(hidden_dim)
    w1 = jax.random.uniform(k1, (input_dim, hidden_dim), jnp.float32, -lim1, lim1)
    b1 = jax.random.uniform(k2, (1, hidden_dim), jnp.float32, -lim1, lim1)
    w2 = jax.random.uniform(k3, (hidden_dim, n_classes), jnp.float32, -lim2, lim2)
    b2 = jax.random.uniform(k4, (1, n_classes), jnp.float32, -lim2, lim2)
    return w1, b1, w2, b2


if __name__ == "__main__":
    key = jax.random.PRNGKey(0)
    batch, input_dim, n_classes = 2, 32, 2   # small shapes; hidden_dim fixed at 500

    kx, kp = jax.random.split(key)
    x = jax.random.normal(kx, (batch, input_dim), jnp.float32)
    params = init_params(kp, input_dim, n_classes)

    logits, pred_cls = sent_classifier(x, params)
    logits, pred_cls = jax.block_until_ready((logits, pred_cls))

    # Reference with the same bf16 dot inputs / f32 accumulate as the kernel.
    w1, b1, w2, b2 = params
    xb, w1b, w2b = (a.astype(jnp.bfloat16) for a in (x, w1, w2))
    h_ref = jnp.maximum(jnp.dot(xb, w1b, preferred_element_type=jnp.float32) + b1, 0.0)
    ref = jnp.dot(h_ref.astype(jnp.bfloat16), w2b,
                  preferred_element_type=jnp.float32) + b2

    assert logits.shape == (batch, n_classes)
    assert jnp.allclose(logits, ref, atol=1e-3, rtol=1e-3), "logits mismatch vs reference"
    # fused argmax must be consistent with the kernel's own logits
    assert jnp.array_equal(pred_cls, jnp.argmax(logits, axis=1)), "argmax mismatch"

    # String label resolved outside the hot path (single host transfer, for demo only).
    _res = class_index_to_label(pred_cls[0])

    print("KERNEL_OK")
</pallas_src>

<mosaic_0001>
module attributes {stable_mosaic.version = 11 : i64} {
  func.func @_mlp_kernel(%arg0: memref<8x128xbf16, #tpu.memory_space<vmem>>, %arg1: memref<128x512xbf16, #tpu.memory_space<vmem>>, %arg2: memref<1x512xf32, #tpu.memory_space<vmem>>, %arg3: memref<512x128xbf16, #tpu.memory_space<vmem>>, %arg4: memref<1x128xf32, #tpu.memory_space<vmem>>, %arg5: memref<8x128xf32, #tpu.memory_space<vmem>>, %arg6: memref<8x128xi32, #tpu.memory_space<vmem>>) attributes {dimension_semantics = [], scalar_prefetch = 0 : i64, scratch_operands = 0 : i64, tpu.core_type = #tpu.core_type<tc>} {
    %c0 = arith.constant 0 : index
    %c0_0 = arith.constant 0 : index
    %0 = vector.load %arg0[%c0, %c0_0] : memref<8x128xbf16, #tpu.memory_space<vmem>>, vector<8x128xbf16>
    %c0_1 = arith.constant 0 : index
    %c0_2 = arith.constant 0 : index
    %1 = vector.load %arg1[%c0_1, %c0_2] : memref<128x512xbf16, #tpu.memory_space<vmem>>, vector<128x512xbf16>
    %cst = arith.constant dense<0.000000e+00> : vector<8x512xf32>
    %2 = tpu.matmul %0, %1, %cst {dimension_numbers = #tpu.dot_dimension_numbers<[1], [0], [0], [1], [0, 0, 1, 1], [], []>} : vector<8x128xbf16>, vector<128x512xbf16>, vector<8x512xf32> -> vector<8x512xf32>
    %c0_3 = arith.constant 0 : index
    %c0_4 = arith.constant 0 : index
    %3 = vector.load %arg2[%c0_3, %c0_4] : memref<1x512xf32, #tpu.memory_space<vmem>>, vector<1x512xf32>
    %4 = vector.broadcast %3 : vector<1x512xf32> to vector<8x512xf32>
    %5 = arith.addf %2, %4 : vector<8x512xf32>
    %cst_5 = arith.constant 0.000000e+00 : f32
    %6 = vector.broadcast %cst_5 : f32 to vector<8x512xf32>
    %7 = arith.maximumf %5, %6 : vector<8x512xf32>
    %8 = arith.truncf %7 : vector<8x512xf32> to vector<8x512xbf16>
    %c0_6 = arith.constant 0 : index
    %c0_7 = arith.constant 0 : index
    %9 = vector.load %arg3[%c0_6, %c0_7] : memref<512x128xbf16, #tpu.memory_space<vmem>>, vector<512x128xbf16>
    %cst_8 = arith.constant dense<0.000000e+00> : vector<8x128xf32>
    %10 = tpu.matmul %8, %9, %cst_8 {dimension_numbers = #tpu.dot_dimension_numbers<[1], [0], [0], [1], [0, 0, 1, 1], [], []>} : vector<8x512xbf16>, vector<512x128xbf16>, vector<8x128xf32> -> vector<8x128xf32>
    %c0_9 = arith.constant 0 : index
    %c0_10 = arith.constant 0 : index
    %11 = vector.load %arg4[%c0_9, %c0_10] : memref<1x128xf32, #tpu.memory_space<vmem>>, vector<1x128xf32>
    %12 = vector.broadcast %11 : vector<1x128xf32> to vector<8x128xf32>
    %13 = arith.addf %10, %12 : vector<8x128xf32>
    %c0_11 = arith.constant 0 : index
    %c0_12 = arith.constant 0 : index
    %14 = vector.load %arg5[%c0_11, %c0_12] : memref<8x128xf32, #tpu.memory_space<vmem>>, vector<8x128xf32>
    tpu.vector_store %arg5[%c0_11, %c0_12], %13 {strides = array<i32>} : memref<8x128xf32, #tpu.memory_space<vmem>>, vector<8x128xf32>,
    %15 = tpu.iota {dimensions = array<i32: 1>} : vector<8x128xi32>
    %c2_i32 = arith.constant 2 : i32
    %16 = vector.broadcast %c2_i32 : i32 to vector<8x128xi32>
    %17 = arith.cmpi slt, %15, %16 : vector<8x128xi32>
    %cst_13 = arith.constant -1.000000e+30 : f32
    %18 = vector.broadcast %cst_13 : f32 to vector<8x128xf32>
    %19 = arith.select %17, %13, %18 : vector<8x128xi1>, vector<8x128xf32>
    %cst_14 = arith.constant dense<0xFF800000> : vector<8xf32>
    %20 = vector.multi_reduction <maximumf>, %19, %cst_14 [1] : vector<8x128xf32> to vector<8xf32>
    %21 = vector.shape_cast %20 : vector<8xf32> to vector<8x1xf32>
    %22 = vector.broadcast %21 : vector<8x1xf32> to vector<8x128xf32>
    %23 = arith.cmpf oeq, %19, %22 : vector<8x128xf32>
    %c128_i32 = arith.constant 128 : i32
    %24 = vector.broadcast %c128_i32 : i32 to vector<8x128xi32>
    %25 = arith.select %23, %15, %24 : vector<8x128xi1>, vector<8x128xi32>
    %cst_15 = arith.constant dense<2147483647> : vector<8xi32>
    %26 = vector.multi_reduction <minsi>, %25, %cst_15 [1] : vector<8x128xi32> to vector<8xi32>
    %27 = vector.shape_cast %26 : vector<8xi32> to vector<8x1xi32>
    %28 = vector.shape_cast %27 : vector<8x1xi32> to vector<8x1xi32>
    %29 = vector.broadcast %28 : vector<8x1xi32> to vector<8x128xi32>
    %c0_16 = arith.constant 0 : index
    %c0_17 = arith.constant 0 : index
    %30 = vector.load %arg6[%c0_16, %c0_17] : memref<8x128xi32, #tpu.memory_space<vmem>>, vector<8x128xi32>
    tpu.vector_store %arg6[%c0_16, %c0_17], %29 {strides = array<i32>} : memref<8x128xi32, #tpu.memory_space<vmem>>, vector<8x128xi32>,
    return
  }
}

</mosaic_0001>

<llo_original>
// kernel: sent_classifier_forward.1
$region0: #{sent_classifier_forward.1}
  #allocation0 [shape = 'u32[]', space=smem, size = 0x4, offset = 0x4, fixed_abs, tag = 'smem constant byte address 0x4 - core index']
  #allocation1 [shape = 'u32[144,128]{1,0:T(1,128)}', space=vmem, size = 0x12000, scoped, tag = 'internal scratch']
  %s0 = inlined_call_operand.vmem [shape: bf16[8,128], index: 0, kind: input, shape index: {}]
  %s1 = inlined_call_operand.vmem [shape: bf16[128,512], index: 1, kind: input, shape index: {}]
  %s2 = inlined_call_operand.vmem [shape: f32[1,512], index: 2, kind: input, shape index: {}]
  %s3 = inlined_call_operand.vmem [shape: bf16[512,128], index: 3, kind: input, shape index: {}]
  %s4 = inlined_call_operand.vmem [shape: f32[1,128], index: 4, kind: input, shape index: {}]
  %s5 = inlined_call_operand.vmem [shape: f32[8,128], index: 5, kind: output, shape index: {0}]
  %s6 = inlined_call_operand.vmem [shape: s32[8,128], index: 6, kind: output, shape index: {1}]
  %7 = xla_tuple %s5, %s6
  %s8 = sld [smem:[#allocation0]]
  $region38: #{sent_classifier_forward.1} parent=0
    _
  %s10 = ssub.s32 1, %s8
  %s11 = scalar_select 0, %s10, %s8
  // Predicated region
  $region2: #{sent_classifier_forward.1} parent=0 // pred_check
    _
  $region3: #{sent_classifier_forward.1} parent=0 // pred_check_branch
    %13 = sbr.rel (0) target = $region5
  $region4: #{sent_classifier_forward.1} parent=0 // pred_region
    _
  $region5: #{sent_classifier_forward.1} parent=0 // pred_fallthru
    _
  // Predicated region
  $region6: #{sent_classifier_forward.1} parent=0 // pred_check
    _
  $region7: #{sent_classifier_forward.1} parent=0 // pred_check_branch
    %15 = sbr.rel (0) target = $region9
  $region8: #{sent_classifier_forward.1} parent=0 // pred_region
    _
  $region9: #{sent_classifier_forward.1} parent=0 // pred_fallthru
    _
  // Predicated region
  $region10: #{sent_classifier_forward.1} parent=0 // pred_check
    _
  $region11: #{sent_classifier_forward.1} parent=0 // pred_check_branch
    %17 = sbr.rel (0) target = $region13
  $region12: #{sent_classifier_forward.1} parent=0 // pred_region
    _
  $region13: #{sent_classifier_forward.1} parent=0 // pred_fallthru
    _
  // Predicated region
  $region14: #{sent_classifier_forward.1} parent=0 // pred_check
    _
  $region15: #{sent_classifier_forward.1} parent=0 // pred_check_branch
    %19 = sbr.rel (0) target = $region17
  $region16: #{sent_classifier_forward.1} parent=0 // pred_region
    _
  $region17: #{sent_classifier_forward.1} parent=0 // pred_fallthru
    _
  // Predicated region
  $region18: #{sent_classifier_forward.1} parent=0 // pred_check
    _
  $region19: #{sent_classifier_forward.1} parent=0 // pred_check_branch
    %21 = sbr.rel (0) target = $region21
  $region20: #{sent_classifier_forward.1} parent=0 // pred_region
    _
  $region21: #{sent_classifier_forward.1} parent=0 // pred_fallthru
    _
  %v23 = vld [vmem:[%s0] sm:$0xf]
  %v24 = vld [vmem:[%s1] sm:$0xff]
  %v25 = vld [vmem:[%s1 + $0x8] sm:$0xff]
  %v26 = vld [vmem:[%s1 + $0x10] sm:$0xff]
  %v27 = vld [vmem:[%s1 + $0x18] sm:$0xff]
  %v28 = vld [vmem:[%s1 + $0x20] sm:$0xff]
  %v29 = vld [vmem:[%s1 + $0x28] sm:$0xff]
  %v30 = vld [vmem:[%s1 + $0x30] sm:$0xff]
  %v31 = vld [vmem:[%s1 + $0x38] sm:$0xff]
  %v32 = vld [vmem:[%s1 + $0x40] sm:$0xff]
  %v33 = vld [vmem:[%s1 + $0x48] sm:$0xff]
  %v34 = vld [vmem:[%s1 + $0x50] sm:$0xff]
  %v35 = vld [vmem:[%s1 + $0x58] sm:$0xff]
  %v36 = vld [vmem:[%s1 + $0x60] sm:$0xff]
  %v37 = vld [vmem:[%s1 + $0x68] sm:$0xff]
  %v38 = vld [vmem:[%s1 + $0x70] sm:$0xff]
  %v39 = vld [vmem:[%s1 + $0x78] sm:$0xff]
  %v40 = vld [vmem:[%s1 + $0x80] sm:$0xff]
  %v41 = vld [vmem:[%s1 + $0x88] sm:$0xff]
  %v42 = vld [vmem:[%s1 + $0x90] sm:$0xff]
  %v43 = vld [vmem:[%s1 + $0x98] sm:$0xff]
  %v44 = vld [vmem:[%s1 + $0xa0] sm:$0xff]
  %v45 = vld [vmem:[%s1 + $0xa8] sm:$0xff]
  %v46 = vld [vmem:[%s1 + $0xb0] sm:$0xff]
  %v47 = vld [vmem:[%s1 + $0xb8] sm:$0xff]
  %v48 = vld [vmem:[%s1 + $0xc0] sm:$0xff]
  %v49 = vld [vmem:[%s1 + $0xc8] sm:$0xff]
  %v50 = vld [vmem:[%s1 + $0xd0] sm:$0xff]
  %v51 = vld [vmem:[%s1 + $0xd8] sm:$0xff]
  %v52 = vld [vmem:[%s1 + $0xe0] sm:$0xff]
  %v53 = vld [vmem:[%s1 + $0xe8] sm:$0xff]
  %v54 = vld [vmem:[%s1 + $0xf0] sm:$0xff]
  %v55 = vld [vmem:[%s1 + $0xf8] sm:$0xff]
  %v56 = vld [vmem:[%s2] sm:$0xf]
  %v58 = vlaneseq
  %v59 = vshrl.u32 %v58, 7
  %v60 = vsub.s32 0, %v59
  %v61 = vrot.slane %v56, %v60
  %v62 = vlaneseq
  %v63 = vshrl.u32 %v62, 7
  %v64 = vsub.s32 1, %v63
  %v65 = vrot.slane %v56, %v64
  %v66 = vlaneseq
  %v67 = vshrl.u32 %v66, 7
  %v68 = vsub.s32 2, %v67
  %v69 = vrot.slane %v56, %v68
  %v70 = vlaneseq
  %v71 = vshrl.u32 %v70, 7
  %v72 = vsub.s32 3, %v71
  %v73 = vrot.slane %v56, %v72
  %v110 = vunpack.c.l.b16 %v24
  %v111 = vunpack.c.h.b16 %v24
  %v112 = vunpack.c.l.b16 %v25
  %v113 = vunpack.c.h.b16 %v25
  %v114 = vunpack.c.l.b16 %v26
  %v115 = vunpack.c.h.b16 %v26
  %v116 = vunpack.c.l.b16 %v27
  %v117 = vunpack.c.h.b16 %v27
  %v118 = vunpack.c.l.b16 %v28
  %v119 = vunpack.c.h.b16 %v28
  %v120 = vunpack.c.l.b16 %v29
  %v121 = vunpack.c.h.b16 %v29
  %v122 = vunpack.c.l.b16 %v30
  %v123 = vunpack.c.h.b16 %v30
  %v124 = vunpack.c.l.b16 %v31
  %v125 = vunpack.c.h.b16 %v31
  %v126 = vunpack.c.l.b16 %v32
  %v127 = vunpack.c.h.b16 %v32
  %v128 = vunpack.c.l.b16 %v33
  %v129 = vunpack.c.h.b16 %v33
  %v130 = vunpack.c.l.b16 %v34
  %v131 = vunpack.c.h.b16 %v34
  %v132 = vunpack.c.l.b16 %v35
  %v133 = vunpack.c.h.b16 %v35
  %v134 = vunpack.c.l.b16 %v36
  %v135 = vunpack.c.h.b16 %v36
  %v136 = vunpack.c.l.b16 %v37
  %v137 = vunpack.c.h.b16 %v37
  %v138 = vunpack.c.l.b16 %v38
  %v139 = vunpack.c.h.b16 %v38
  %v140 = vunpack.c.l.b16 %v39
  %v141 = vunpack.c.h.b16 %v39
  %v142 = vunpack.c.l.b16 %v40
  %v143 = vunpack.c.h.b16 %v40
  %v144 = vunpack.c.l.b16 %v41
  %v145 = vunpack.c.h.b16 %v41
  %v146 = vunpack.c.l.b16 %v42
  %v147 = vunpack.c.h.b16 %v42
  %v148 = vunpack.c.l.b16 %v43
  %v149 = vunpack.c.h.b16 %v43
  %v150 = vunpack.c.l.b16 %v44
  %v151 = vunpack.c.h.b16 %v44
  %v152 = vunpack.c.l.b16 %v45
  %v153 = vunpack.c.h.b16 %v45
  %v154 = vunpack.c.l.b16 %v46
  %v155 = vunpack.c.h.b16 %v46
  %v156 = vunpack.c.l.b16 %v47
  %v157 = vunpack.c.h.b16 %v47
  %v158 = vunpack.c.l.b16 %v48
  %v159 = vunpack.c.h.b16 %v48
  %v160 = vunpack.c.l.b16 %v49
  %v161 = vunpack.c.h.b16 %v49
  %v162 = vunpack.c.l.b16 %v50
  %v163 = vunpack.c.h.b16 %v50
  %v164 = vunpack.c.l.b16 %v51
  %v165 = vunpack.c.h.b16 %v51
  %v166 = vunpack.c.l.b16 %v52
  %v167 = vunpack.c.h.b16 %v52
  %v168 = vunpack.c.l.b16 %v53
  %v169 = vunpack.c.h.b16 %v53
  %v170 = vunpack.c.l.b16 %v54
  %v171 = vunpack.c.h.b16 %v54
  %v172 = vunpack.c.l.b16 %v55
  %v173 = vunpack.c.h.b16 %v55
  %v174 = vpack.c.b16 %v114, %v110
  %v175 = vpack.c.b16 %v115, %v111
  %v176 = vpack.c.b16 %v116, %v112
  %v177 = vpack.c.b16 %v117, %v113
  %v178 = vpack.c.b16 %v122, %v118
  %v179 = vpack.c.b16 %v123, %v119
  %v180 = vpack.c.b16 %v124, %v120
  %v181 = vpack.c.b16 %v125, %v121
  %v182 = vpack.c.b16 %v130, %v126
  %v183 = vpack.c.b16 %v131, %v127
  %v184 = vpack.c.b16 %v132, %v128
  %v185 = vpack.c.b16 %v133, %v129
  %v186 = vpack.c.b16 %v138, %v134
  %v187 = vpack.c.b16 %v139, %v135
  %v188 = vpack.c.b16 %v140, %v136
  %v189 = vpack.c.b16 %v141, %v137
  %v190 = vpack.c.b16 %v146, %v142
  %v191 = vpack.c.b16 %v147, %v143
  %v192 = vpack.c.b16 %v148, %v144
  %v193 = vpack.c.b16 %v149, %v145
  %v194 = vpack.c.b16 %v154, %v150
  %v195 = vpack.c.b16 %v155, %v151
  %v196 = vpack.c.b16 %v156, %v152
  %v197 = vpack.c.b16 %v157, %v153
  %v198 = vpack.c.b16 %v162, %v158
  %v199 = vpack.c.b16 %v163, %v159
  %v200 = vpack.c.b16 %v164, %v160
  %v201 = vpack.c.b16 %v165, %v161
  %v202 = vpack.c.b16 %v170, %v166
  %v203 = vpack.c.b16 %v171, %v167
  %v204 = vpack.c.b16 %v172, %v168
  %v205 = vpack.c.b16 %v173, %v169
  %238 = vmatprep.subr.bf16.mxu0 %v175
  %239 = vmatpush1.bf16.msra.mxu0 %v174
  %240 = vmatprep.subr.bf16.mxu0 %v179
  %241 = vmatpush1.bf16.msra.mxu0 %v178
  %242 = vmatprep.subr.bf16.mxu0 %v183
  %243 = vmatpush1.bf16.msra.mxu0 %v182
  %244 = vmatprep.subr.bf16.mxu0 %v187
  %245 = vmatpush1.bf16.msra.mxu0 %v186
  %246 = vmatprep.subr.bf16.mxu0 %v191
  %247 = vmatpush1.bf16.msra.mxu0 %v190
  %248 = vmatprep.subr.bf16.mxu0 %v195
  %249 = vmatpush1.bf16.msra.mxu0 %v194
  %250 = vmatprep.subr.bf16.mxu0 %v199
  %251 = vmatpush1.bf16.msra.mxu0 %v198
  %252 = vmatprep.subr.bf16.mxu0 %v203
  %253 = vmatpush1.bf16.msra.mxu0 %v202
  %254 = vmatprep.subr.bf16.mxu0 0
  %255 = vmatpush1.bf16.msra.mxu0 0
  %256 = vmatprep.subr.bf16.mxu0 0
  %257 = vmatpush1.bf16.msra.mxu0 0
  %258 = vmatprep.subr.bf16.mxu0 0
  %259 = vmatpush1.bf16.msra.mxu0 0
  %260 = vmatprep.subr.bf16.mxu0 0
  %261 = vmatpush1.bf16.msra.mxu0 0
  %262 = vmatprep.subr.bf16.mxu0 0
  %263 = vmatpush1.bf16.msra.mxu0 0
  %264 = vmatprep.subr.bf16.mxu0 0
  %265 = vmatpush1.bf16.msra.mxu0 0
  %266 = vmatprep.subr.bf16.mxu0 0
  %267 = vmatpush1.bf16.msra.mxu0 0
  %268 = vmatprep.subr.bf16.mxu0 0
  %269 = vmatpush1.bf16.msra.mxu0 0
  %270 = vmatprep.mubr.bf16.mxu0 0
  %271 = vmatmul.mubr.bf16.gmra.mrb[0].mxu0 %v23
  %v272 = vpop.f32.mrb[0].mxu0
  %v273 = vadd.f32 %v61, %v272
  %v274 = vpop.f32.mrb[0].mxu0
  %v275 = vadd.f32 %v65, %v274
  %v276 = vpop.f32.mrb[0].mxu0
  %v277 = vpop.f32.mrb[0].mxu0
  %278 = vdwg.mxu0
  %279 = vmatprep.subr.bf16.mxu0 %v177
  %280 = vmatpush1.bf16.msra.mxu0 %v176
  %281 = vmatprep.subr.bf16.mxu0 %v181
  %282 = vmatpush1.bf16.msra.mxu0 %v180
  %283 = vmatprep.subr.bf16.mxu0 %v185
  %284 = vmatpush1.bf16.msra.mxu0 %v184
  %285 = vmatprep.subr.bf16.mxu0 %v189
  %286 = vmatpush1.bf16.msra.mxu0 %v188
  %287 = vmatprep.subr.bf16.mxu0 %v193
  %288 = vmatpush1.bf16.msra.mxu0 %v192
  %289 = vmatprep.subr.bf16.mxu0 %v197
  %290 = vmatpush1.bf16.msra.mxu0 %v196
  %291 = vmatprep.subr.bf16.mxu0 %v201
  %292 = vmatpush1.bf16.msra.mxu0 %v200
  %293 = vmatprep.subr.bf16.mxu0 %v205
  %294 = vmatpush1.bf16.msra.mxu0 %v204
  %295 = vmatprep.subr.bf16.mxu0 0
  %296 = vmatpush1.bf16.msra.mxu0 0
  %297 = vmatprep.subr.bf16.mxu0 0
  %298 = vmatpush1.bf16.msra.mxu0 0
  %299 = vmatprep.subr.bf16.mxu0 0
  %300 = vmatpush1.bf16.msra.mxu0 0
  %301 = vmatprep.subr.bf16.mxu0 0
  %302 = vmatpush1.bf16.msra.mxu0 0
  %303 = vmatprep.subr.bf16.mxu0 0
  %304 = vmatpush1.bf16.msra.mxu0 0
  %305 = vmatprep.subr.bf16.mxu0 0
  %306 = vmatpush1.bf16.msra.mxu0 0
  %307 = vmatprep.subr.bf16.mxu0 0
  %308 = vmatpush1.bf16.msra.mxu0 0
  %309 = vmatprep.subr.bf16.mxu0 0
  %310 = vmatpush1.bf16.msra.mxu0 0
  %311 = vmatprep.mubr.bf16.mxu0 0
  %312 = vmatmul.mubr.bf16.gmra.mrb[0].mxu0 %v23
  %v313 = vpop.f32.mrb[0].mxu0
  %v314 = vadd.f32 %v69, %v313
  %v315 = vpop.f32.mrb[0].mxu0
  %v316 = vadd.f32 %v73, %v315
  %v317 = vpop.f32.mrb[0].mxu0
  %v318 = vpop.f32.mrb[0].mxu0
  %319 = vdwg.mxu0
  %v320 = vmax.f32 %v273, 0.0
  %v321 = vmax.f32 %v275, 0.0
  %v322 = vmax.f32 %v314, 0.0
  %v323 = vmax.f32 %v316, 0.0
  %v324 = vpack.c.bf16 %v320, %v320
  %v325 = vpack.c.bf16 %v321, %v321
  %v326 = vpack.c.bf16 %v322, %v322
  %v327 = vpack.c.bf16 %v323, %v323
  %v328 = vld [vmem:[%s3] sm:$0xf]
  %v329 = vld [vmem:[%s3 + $0x4] sm:$0xf]
  %v330 = vld [vmem:[%s3 + $0x8] sm:$0xf]
  %v331 = vld [vmem:[%s3 + $0xc] sm:$0xf]
  %v332 = vld [vmem:[%s3 + $0x10] sm:$0xf]
  %v333 = vld [vmem:[%s3 + $0x14] sm:$0xf]
  %v334 = vld [vmem:[%s3 + $0x18] sm:$0xf]
  %v335 = vld [vmem:[%s3 + $0x1c] sm:$0xf]
  %v336 = vld [vmem:[%s3 + $0x20] sm:$0xf]
  %v337 = vld [vmem:[%s3 + $0x24] sm:$0xf]
  %v338 = vld [vmem:[%s3 + $0x28] sm:$0xf]
  %v339 = vld [vmem:[%s3 + $0x2c] sm:$0xf]
  %v340 = vld [vmem:[%s3 + $0x30] sm:$0xf]
  %v341 = vld [vmem:[%s3 + $0x34] sm:$0xf]
  %v342 = vld [vmem:[%s3 + $0x38] sm:$0xf]
  %v343 = vld [vmem:[%s3 + $0x3c] sm:$0xf]
  %v344 = vld [vmem:[%s3 + $0x40] sm:$0xf]
  %v345 = vld [vmem:[%s3 + $0x44] sm:$0xf]
  %v346 = vld [vmem:[%s3 + $0x48] sm:$0xf]
  %v347 = vld [vmem:[%s3 + $0x4c] sm:$0xf]
  %v348 = vld [vmem:[%s3 + $0x50] sm:$0xf]
  %v349 = vld [vmem:[%s3 + $0x54] sm:$0xf]
  %v350 = vld [vmem:[%s3 + $0x58] sm:$0xf]
  %v351 = vld [vmem:[%s3 + $0x5c] sm:$0xf]
  %v352 = vld [vmem:[%s3 + $0x60] sm:$0xf]
  %v353 = vld [vmem:[%s3 + $0x64] sm:$0xf]
  %v354 = vld [vmem:[%s3 + $0x68] sm:$0xf]
  %v355 = vld [vmem:[%s3 + $0x6c] sm:$0xf]
  %v356 = vld [vmem:[%s3 + $0x70] sm:$0xf]
  %v357 = vld [vmem:[%s3 + $0x74] sm:$0xf]
  %v358 = vld [vmem:[%s3 + $0x78] sm:$0xf]
  %v359 = vld [vmem:[%s3 + $0x7c] sm:$0xf]
  %v360 = vld [vmem:[%s3 + $0x80] sm:$0xf]
  %v361 = vld [vmem:[%s3 + $0x84] sm:$0xf]
  %v362 = vld [vmem:[%s3 + $0x88] sm:$0xf]
  %v363 = vld [vmem:[%s3 + $0x8c] sm:$0xf]
  %v364 = vld [vmem:[%s3 + $0x90] sm:$0xf]
  %v365 = vld [vmem:[%s3 + $0x94] sm:$0xf]
  %v366 = vld [vmem:[%s3 + $0x98] sm:$0xf]
  %v367 = vld [vmem:[%s3 + $0x9c] sm:$0xf]
  %v368 = vld [vmem:[%s3 + $0xa0] sm:$0xf]
  %v369 = vld [vmem:[%s3 + $0xa4] sm:$0xf]
  %v370 = vld [vmem:[%s3 + $0xa8] sm:$0xf]
  %v371 = vld [vmem:[%s3 + $0xac] sm:$0xf]
  %v372 = vld [vmem:[%s3 + $0xb0] sm:$0xf]
  %v373 = vld [vmem:[%s3 + $0xb4] sm:$0xf]
  %v374 = vld [vmem:[%s3 + $0xb8] sm:$0xf]
  %v375 = vld [vmem:[%s3 + $0xbc] sm:$0xf]
  %v376 = vld [vmem:[%s3 + $0xc0] sm:$0xf]
  %v377 = vld [vmem:[%s3 + $0xc4] sm:$0xf]
  %v378 = vld [vmem:[%s3 + $0xc8] sm:$0xf]
  %v379 = vld [vmem:[%s3 + $0xcc] sm:$0xf]
  %v380 = vld [vmem:[%s3 + $0xd0] sm:$0xf]
  %v381 = vld [vmem:[%s3 + $0xd4] sm:$0xf]
  %v382 = vld [vmem:[%s3 + $0xd8] sm:$0xf]
  %v383 = vld [vmem:[%s3 + $0xdc] sm:$0xf]
  %v384 = vld [vmem:[%s3 + $0xe0] sm:$0xf]
  %v385 = vld [vmem:[%s3 + $0xe4] sm:$0xf]
  %v386 = vld [vmem:[%s3 + $0xe8] sm:$0xf]
  %v387 = vld [vmem:[%s3 + $0xec] sm:$0xf]
  %v388 = vld [vmem:[%s3 + $0xf0] sm:$0xf]
  %v389 = vld [vmem:[%s3 + $0xf4] sm:$0xf]
  %v390 = vld [vmem:[%s3 + $0xf8] sm:$0xf]
  %v391 = vld [vmem:[%s3 + $0xfc] sm:$0xf]
  %v392 = vld [vmem:[%s4] sm:$0x1]
  %v394 = vlaneseq
  %v395 = vshrl.u32 %v394, 7
  %v396 = vsub.s32 0, %v395
  %v397 = vrot.slane %v392, %v396
  %v463 = vunpack.c.l.b16 %v328
  %v464 = vunpack.c.l.b16 %v329
  %v465 = vunpack.c.l.b16 %v330
  %v466 = vunpack.c.l.b16 %v331
  %v467 = vunpack.c.l.b16 %v332
  %v468 = vunpack.c.l.b16 %v333
  %v469 = vunpack.c.l.b16 %v334
  %v470 = vunpack.c.l.b16 %v335
  %v471 = vunpack.c.l.b16 %v336
  %v472 = vunpack.c.l.b16 %v337
  %v473 = vunpack.c.l.b16 %v338
  %v474 = vunpack.c.l.b16 %v339
  %v475 = vunpack.c.l.b16 %v340
  %v476 = vunpack.c.l.b16 %v341
  %v477 = vunpack.c.l.b16 %v342
  %v478 = vunpack.c.l.b16 %v343
  %v479 = vunpack.c.l.b16 %v344
  %v480 = vunpack.c.l.b16 %v345
  %v481 = vunpack.c.l.b16 %v346
  %v482 = vunpack.c.l.b16 %v347
  %v483 = vunpack.c.l.b16 %v348
  %v484 = vunpack.c.l.b16 %v349
  %v485 = vunpack.c.l.b16 %v350
  %v486 = vunpack.c.l.b16 %v351
  %v487 = vunpack.c.l.b16 %v352
  %v488 = vunpack.c.l.b16 %v353
  %v489 = vunpack.c.l.b16 %v354
  %v490 = vunpack.c.l.b16 %v355
  %v491 = vunpack.c.l.b16 %v356
  %v492 = vunpack.c.l.b16 %v357
  %v493 = vunpack.c.l.b16 %v358
  %v494 = vunpack.c.l.b16 %v359
  %v495 = vunpack.c.l.b16 %v360
  %v496 = vunpack.c.l.b16 %v361
  %v497 = vunpack.c.l.b16 %v362
  %v498 = vunpack.c.l.b16 %v363
  %v499 = vunpack.c.l.b16 %v364
  %v500 = vunpack.c.l.b16 %v365
  %v501 = vunpack.c.l.b16 %v366
  %v502 = vunpack.c.l.b16 %v367
  %v503 = vunpack.c.l.b16 %v368
  %v504 = vunpack.c.l.b16 %v369
  %v505 = vunpack.c.l.b16 %v370
  %v506 = vunpack.c.l.b16 %v371
  %v507 = vunpack.c.l.b16 %v372
  %v508 = vunpack.c.l.b16 %v373
  %v509 = vunpack.c.l.b16 %v374
  %v510 = vunpack.c.l.b16 %v375
  %v511 = vunpack.c.l.b16 %v376
  %v512 = vunpack.c.l.b16 %v377
  %v513 = vunpack.c.l.b16 %v378
  %v514 = vunpack.c.l.b16 %v379
  %v515 = vunpack.c.l.b16 %v380
  %v516 = vunpack.c.l.b16 %v381
  %v517 = vunpack.c.l.b16 %v382
  %v518 = vunpack.c.l.b16 %v383
  %v519 = vunpack.c.l.b16 %v384
  %v520 = vunpack.c.l.b16 %v385
  %v521 = vunpack.c.l.b16 %v386
  %v522 = vunpack.c.l.b16 %v387
  %v523 = vunpack.c.l.b16 %v388
  %v524 = vunpack.c.l.b16 %v389
  %v525 = vunpack.c.l.b16 %v390
  %v526 = vunpack.c.l.b16 %v391
  %v527 = vpack.c.b16 %v464, %v463
  %v528 = vpack.c.b16 %v466, %v465
  %v529 = vpack.c.b16 %v468, %v467
  %v530 = vpack.c.b16 %v470, %v469
  %v531 = vpack.c.b16 %v472, %v471
  %v532 = vpack.c.b16 %v474, %v473
  %v533 = vpack.c.b16 %v476, %v475
  %v534 = vpack.c.b16 %v478, %v477
  %v535 = vpack.c.b16 %v480, %v479
  %v536 = vpack.c.b16 %v482, %v481
  %v537 = vpack.c.b16 %v484, %v483
  %v538 = vpack.c.b16 %v486, %v485
  %v539 = vpack.c.b16 %v488, %v487
  %v540 = vpack.c.b16 %v490, %v489
  %v541 = vpack.c.b16 %v492, %v491
  %v542 = vpack.c.b16 %v494, %v493
  %v543 = vpack.c.b16 %v496, %v495
  %v544 = vpack.c.b16 %v498, %v497
  %v545 = vpack.c.b16 %v500, %v499
  %v546 = vpack.c.b16 %v502, %v501
  %v547 = vpack.c.b16 %v504, %v503
  %v548 = vpack.c.b16 %v506, %v505
  %v549 = vpack.c.b16 %v508, %v507
  %v550 = vpack.c.b16 %v510, %v509
  %v551 = vpack.c.b16 %v512, %v511
  %v552 = vpack.c.b16 %v514, %v513
  %v553 = vpack.c.b16 %v516, %v515
  %v554 = vpack.c.b16 %v518, %v517
  %v555 = vpack.c.b16 %v520, %v519
  %v556 = vpack.c.b16 %v522, %v521
  %v557 = vpack.c.b16 %v524, %v523
  %v558 = vpack.c.b16 %v526, %v525
  %591 = vmatprep.subr.bf16.mxu0 0
  %592 = vmatpush1.bf16.msra.mxu0 %v527
  %593 = vmatprep.subr.bf16.mxu0 0
  %594 = vmatpush1.bf16.msra.mxu0 %v528
  %595 = vmatprep.subr.bf16.mxu0 0
  %596 = vmatpush1.bf16.msra.mxu0 %v529
  %597 = vmatprep.subr.bf16.mxu0 0
  %598 = vmatpush1.bf16.msra.mxu0 %v530
  %599 = vmatprep.subr.bf16.mxu0 0
  %600 = vmatpush1.bf16.msra.mxu0 %v531
  %601 = vmatprep.subr.bf16.mxu0 0
  %602 = vmatpush1.bf16.msra.mxu0 %v532
  %603 = vmatprep.subr.bf16.mxu0 0
  %604 = vmatpush1.bf16.msra.mxu0 %v533
  %605 = vmatprep.subr.bf16.mxu0 0
  %606 = vmatpush1.bf16.msra.mxu0 %v534
  %607 = vmatprep.subr.bf16.mxu0 0
  %608 = vmatpush1.bf16.msra.mxu0 %v535
  %609 = vmatprep.subr.bf16.mxu0 0
  %610 = vmatpush1.bf16.msra.mxu0 %v536
  %611 = vmatprep.subr.bf16.mxu0 0
  %612 = vmatpush1.bf16.msra.mxu0 %v537
  %613 = vmatprep.subr.bf16.mxu0 0
  %614 = vmatpush1.bf16.msra.mxu0 %v538
  %615 = vmatprep.subr.bf16.mxu0 0
  %616 = vmatpush1.bf16.msra.mxu0 %v539
  %617 = vmatprep.subr.bf16.mxu0 0
  %618 = vmatpush1.bf16.msra.mxu0 %v540
  %619 = vmatprep.subr.bf16.mxu0 0
  %620 = vmatpush1.bf16.msra.mxu0 %v541
  %621 = vmatprep.subr.bf16.mxu0 0
  %622 = vmatpush1.bf16.msra.mxu0 %v542
  %623 = vmatprep.mubr.bf16.mxu0 %v325
  %624 = vmatmul.mubr.bf16.gmra.mrb[0].mxu0 %v324
  %v625 = vpop.f32.mrb[0].mxu0
  %v626 = vadd.f32 %v397, %v625
  %v627 = vpop.f32.mrb[0].mxu0
  %v628 = vpop.f32.mrb[0].mxu0
  %v629 = vpop.f32.mrb[0].mxu0
  %630 = vdwg.mxu0
  %631 = vmatprep.subr.bf16.mxu0 0
  %632 = vmatpush1.bf16.msra.mxu0 %v543
  %633 = vmatprep.subr.bf16.mxu0 0
  %634 = vmatpush1.bf16.msra.mxu0 %v544
  %635 = vmatprep.subr.bf16.mxu0 0
  %636 = vmatpush1.bf16.msra.mxu0 %v545
  %637 = vmatprep.subr.bf16.mxu0 0
  %638 = vmatpush1.bf16.msra.mxu0 %v546
  %639 = vmatprep.subr.bf16.mxu0 0
  %640 = vmatpush1.bf16.msra.mxu0 %v547
  %641 = vmatprep.subr.bf16.mxu0 0
  %642 = vmatpush1.bf16.msra.mxu0 %v548
  %643 = vmatprep.subr.bf16.mxu0 0
  %644 = vmatpush1.bf16.msra.mxu0 %v549
  %645 = vmatprep.subr.bf16.mxu0 0
  %646 = vmatpush1.bf16.msra.mxu0 %v550
  %647 = vmatprep.subr.bf16.mxu0 0
  %648 = vmatpush1.bf16.msra.mxu0 %v551
  %649 = vmatprep.subr.bf16.mxu0 0
  %650 = vmatpush1.bf16.msra.mxu0 %v552
  %651 = vmatprep.subr.bf16.mxu0 0
  %652 = vmatpush1.bf16.msra.mxu0 %v553
  %653 = vmatprep.subr.bf16.mxu0 0
  %654 = vmatpush1.bf16.msra.mxu0 %v554
  %655 = vmatprep.subr.bf16.mxu0 0
  %656 = vmatpush1.bf16.msra.mxu0 %v555
  %657 = vmatprep.subr.bf16.mxu0 0
  %658 = vmatpush1.bf16.msra.mxu0 %v556
  %659 = vmatprep.subr.bf16.mxu0 0
  %660 = vmatpush1.bf16.msra.mxu0 %v557
  %661 = vmatprep.subr.bf16.mxu0 0
  %662 = vmatpush1.bf16.msra.mxu0 %v558
  %663 = vmatprep.mubr.bf16.mxu0 %v327
  %664 = vmatmul.mubr.bf16.gmra.mrb[0].mxu0 %v326
  %v665 = vpop.f32.mrb[0].mxu0
  %v666 = vadd.f32 %v626, %v665
  %v667 = vpop.f32.mrb[0].mxu0
  %v668 = vpop.f32.mrb[0].mxu0
  %v669 = vpop.f32.mrb[0].mxu0
  %670 = vdwg.mxu0
  %671 = vst [vmem:[%s5] sm:$0xff] %v666
  %v672 = vlaneseq
  %v673 = vand.u32 %v672, 127
  %vm674 = vcmp.lt.s32.totalorder %v673, 2
  %v675 = vsel %vm674, %v666, -1e+30
  %676 = vmax.xlane.f32.xlu0 %v675
  %v677 = vpop.xlane.xlu0 %676
  %vm678 = vcmp.eq.f32.partialorder %v675, %v677
  %v679 = vsel %vm678, %v673, 128
  %v680 = vand.u32 %v679, 65535
  %v681 = vshra.s32 %v679, 16
  %v682 = vcvt.s32.f32 %v680
  %v683 = vcvt.s32.f32 %v681
  %684 = vmin.xlane.f32.xlu0 %v683
  %v685 = vpop.xlane.xlu0 %684
  %vm686 = vcmp.eq.f32.partialorder %v683, %v685
  %v687 = vsel %vm686, %v682, inf
  %688 = vmin.xlane.f32.xlu0 %v687
  %v689 = vpop.xlane.xlu0 %688
  %v690 = vcvt.f32.s32 %v689
  %v691 = vcvt.f32.s32 %v685
  %v692 = vshll.u32 %v691, 16
  %v693 = vadd.s32 %v692, %v690
  %694 = vst [vmem:[%s6] sm:$0xff] %v693
  // Predicated region
  $region22: #{sent_classifier_forward.1} parent=0 // pred_check
    _
  $region23: #{sent_classifier_forward.1} parent=0 // pred_check_branch
    %696 = sbr.rel (0) target = $region25
  $region24: #{sent_classifier_forward.1} parent=0 // pred_region
    _
  $region25: #{sent_classifier_forward.1} parent=0 // pred_fallthru
    _
  // Predicated region
  $region26: #{sent_classifier_forward.1} parent=0 // pred_check
    _
  $region27: #{sent_classifier_forward.1} parent=0 // pred_check_branch
    %698 = sbr.rel (0) target = $region29
  $region28: #{sent_classifier_forward.1} parent=0 // pred_region
    _
  $region29: #{sent_classifier_forward.1} parent=0 // pred_fallthru
    _
  // Predicated region
  $region30: #{sent_classifier_forward.1} parent=0 // pred_check
    _
  $region31: #{sent_classifier_forward.1} parent=0 // pred_check_branch
    %700 = sbr.rel (0) target = $region33
  $region32: #{sent_classifier_forward.1} parent=0 // pred_region
    _
  $region33: #{sent_classifier_forward.1} parent=0 // pred_fallthru
    _
  // Predicated region
  $region34: #{sent_classifier_forward.1} parent=0 // pred_check
    _
  $region35: #{sent_classifier_forward.1} parent=0 // pred_check_branch
    %702 = sbr.rel (0) target = $region37
  $region36: #{sent_classifier_forward.1} parent=0 // pred_region
    _
  $region37: #{sent_classifier_forward.1} parent=0 // pred_fallthru
    _

</llo_original>
